<compile_context>
chip_gen: v6e
topology: v6e:2x2x1
jax: 0.10.0
libtpu: 0.0.40
codegen_flags: <defaults>
</compile_context>

<pallas_src>
import functools

import jax
import jax.numpy as jnp
from jax.experimental import pallas as pl
from jax.experimental.pallas import tpu as pltpu

NUM_POS_FEATS = 64
TEMPERATURE = 10000.0


def _round_up(v, m):
    return -(-v // m) * m


def _pe_kernel(x_ref, c_ref, out_ref, *, pack):
    """x_ref  : (tr, pack)        f32 -- `pack` consecutive positions per row
       c_ref  : (pack+1, pack*F)  f32 -- rows 0..pack-1: inv_dim_t placed at
                                         lanes [p*F, (p+1)*F) (zeros elsewhere);
                                         last row: phase (0 / pi/2) tiled.
       out_ref: (tr, pack*F)

       out[r, p*F + j] = sin(x[r, p] * inv_dim_t[j] + phase[j])
                       = sin(pos/dim_t[j])  (j even)  /  cos(pos/dim_t[j]) (j odd)
       i.e. exactly the PyTorch stack([sin(even), cos(odd)], -1).flatten(1)
       layout, because dim_t[2k] == dim_t[2k+1] and cos(t) == sin(t + pi/2).
    """
    x = x_ref[...]                       # (tr, pack)
    c = c_ref[...]                       # (pack+1, pack*F)
    v = c[pack:pack + 1, :]              # phase row; broadcasts to (tr, pack*F)
    for p in range(pack):                # pack is a static Python int (1 or 2)
        v = v + x[:, p:p + 1] * c[p:p + 1, :]
    out_ref[...] = jnp.sin(v).astype(out_ref.dtype)


def pe_forward(x, num_pos_feats=NUM_POS_FEATS, temperature=TEMPERATURE,
               row_tile=8192, out_dtype=jnp.float32):
    """Pallas equivalent of PE.forward.  x: (B, N) -> (B, N * num_pos_feats)."""
    B, N = x.shape
    F = num_pos_feats
    R = B * N

    # Packing: 2 positions per kernel row (128 lanes, unmasked vst) when B*N is
    # even; 1 position / 64 lanes when odd.  Either way the kernel output is
    # bit-identical, row-major, to (B, N*F): no pad, no slice, no output copy.
    pack = 2 if R % 2 == 0 else 1
    W = pack * F
    rows = R // pack
    xp = x.reshape(rows, pack).astype(jnp.float32)

    # Constants (same formula as the PyTorch buffer); reciprocal precomputed,
    # cos folded into sin via a +pi/2 phase on odd features.
    i = jnp.arange(F)
    dim_t = (temperature ** ((2 * (i // 2)).astype(jnp.float32) / F)
             ).astype(jnp.float32)
    inv = (1.0 / dim_t).astype(jnp.float32)
    phase = jnp.where(i % 2 == 1, jnp.float32(jnp.pi / 2), jnp.float32(0.0))
    scale_rows = []
    for p in range(pack):
        scale_rows.append(
            jnp.zeros((W,), jnp.float32).at[p * F:(p + 1) * F].set(inv))
    c = jnp.stack(scale_rows + [jnp.tile(phase, pack)], axis=0)   # (pack+1, W)

    # Row-tile selection (tile rows must be a multiple of 8 or the full extent).
    row_tile = max(8, _round_up(int(row_tile), 8))
    if rows > row_tile:
        tr = row_tile
    elif rows >= 1024:
        # Big enough that >=2 grid steps are worth the per-step overhead:
        # lets v7x shard the "parallel" row axis over both TensorCores.
        tr = _round_up(pl.cdiv(rows, 2), 8)
    else:
        tr = rows                         # single full-extent block
    grid = (pl.cdiv(rows, tr),)

    out = pl.pallas_call(
        functools.partial(_pe_kernel, pack=pack),
        out_shape=jax.ShapeDtypeStruct((rows, W), out_dtype),
        grid=grid,
        in_specs=[
            pl.BlockSpec((tr, pack), lambda g: (g, 0)),
            pl.BlockSpec((pack + 1, W), lambda g: (0, 0)),   # grid-invariant
        ],
        out_specs=pl.BlockSpec((tr, W), lambda g: (g, 0)),
        compiler_params=pltpu.CompilerParams(
            dimension_semantics=("parallel",),
            # tr=8192, pack=2: 2x4 MiB input + 2x4 MiB output double buffers
            # = 16 MiB; raise the scoped limit above v5e's 16 MiB default while
            # staying well inside v7x's 64 MiB physical VMEM per core.
            vmem_limit_bytes=32 * 1024 * 1024,
        ),
    )(xp, c)

    # (rows, W) row-major is the same memory layout as (B, N*F): free reshape.
    return out.reshape(B, N * F)


def pe_reference(x, num_pos_feats=NUM_POS_FEATS, temperature=TEMPERATURE):
    """Pure-JAX reference mirroring the PyTorch code path exactly."""
    i = jnp.arange(num_pos_feats)
    dim_t = (temperature ** ((2 * (i // 2)).astype(jnp.float32) / num_pos_feats)
             ).astype(jnp.float32)
    pos_x = x[:, :, None] / dim_t                      # (B, N, F)
    s = jnp.sin(pos_x[:, :, 0::2])                     # (B, N, F/2)
    c = jnp.cos(pos_x[:, :, 1::2])                     # (B, N, F/2)
    pos = jnp.stack([s, c], axis=3)                    # (B, N, F/2, 2)
    return pos.reshape(x.shape[0], -1)                 # (B, N*F)


if __name__ == "__main__":
    key = jax.random.PRNGKey(0)
    B, N = 2, 8
    # Position-like inputs (coordinates scaled up a bit).
    x = jax.random.uniform(key, (B, N), dtype=jnp.float32) * 16.0

    out = jax.block_until_ready(pe_forward(x))
    ref = pe_reference(x)
    assert out.shape == (B, N * NUM_POS_FEATS), out.shape
    assert jnp.allclose(out, ref, atol=2e-5, rtol=1e-5), "mismatch vs reference"

    # Extra coverage flagged by review: odd B*N (1-position / 64-lane path) and
    # a partial last row-block (rows not a multiple of the row tile).
    k1, k2 = jax.random.split(key)
    x_odd = jax.random.uniform(k1, (1, 7), dtype=jnp.float32) * 16.0
    out_odd = jax.block_until_ready(pe_forward(x_odd))
    assert jnp.allclose(out_odd, pe_reference(x_odd), atol=2e-5, rtol=1e-5), \
        "mismatch on odd B*N path"

    x_part = jax.random.uniform(k2, (2, 27), dtype=jnp.float32) * 16.0
    out_part = jax.block_until_ready(pe_forward(x_part, row_tile=8))
    assert jnp.allclose(out_part, pe_reference(x_part), atol=2e-5, rtol=1e-5), \
        "mismatch on partial-last-block path"

    print("KERNEL_OK")
</pallas_src>

<mosaic_0001>
module attributes {stable_mosaic.version = 11 : i64} {
  func.func @_pe_kernel(%arg0: i32, %arg1: memref<8x2xf32, #tpu.memory_space<vmem>>, %arg2: memref<3x128xf32, #tpu.memory_space<vmem>>, %arg3: memref<8x128xf32, #tpu.memory_space<vmem>>) attributes {dimension_semantics = [#tpu.dimension_semantics<parallel>], iteration_bounds = array<i64: 1>, scalar_prefetch = 0 : i64, scratch_operands = 0 : i64, tpu.core_type = #tpu.core_type<tc>, window_params = [{transform_indices = @transform_0, window_bounds = array<i64: 8, 2>}, {pipeline_mode = #tpu.pipeline_mode<synchronous>, transform_indices = @transform_1, window_bounds = array<i64: 3, 128>}, {transform_indices = @transform_2, window_bounds = array<i64: 8, 128>}]} {
    %c0 = arith.constant 0 : index
    %c0_0 = arith.constant 0 : index
    %0 = vector.load %arg1[%c0, %c0_0] : memref<8x2xf32, #tpu.memory_space<vmem>>, vector<8x2xf32>
    %c0_1 = arith.constant 0 : index
    %c0_2 = arith.constant 0 : index
    %1 = vector.load %arg2[%c0_1, %c0_2] : memref<3x128xf32, #tpu.memory_space<vmem>>, vector<3x128xf32>
    %2 = vector.extract_strided_slice %1 {offsets = [2, 0], sizes = [1, 128], strides = [1, 1]} : vector<3x128xf32> to vector<1x128xf32>
    %3 = vector.extract_strided_slice %0 {offsets = [0, 0], sizes = [8, 1], strides = [1, 1]} : vector<8x2xf32> to vector<8x1xf32>
    %4 = vector.extract_strided_slice %1 {offsets = [0, 0], sizes = [1, 128], strides = [1, 1]} : vector<3x128xf32> to vector<1x128xf32>
    %5 = vector.broadcast %3 : vector<8x1xf32> to vector<8x128xf32>
    %6 = vector.broadcast %4 : vector<1x128xf32> to vector<8x128xf32>
    %7 = arith.mulf %5, %6 : vector<8x128xf32>
    %8 = vector.broadcast %2 : vector<1x128xf32> to vector<8x128xf32>
    %9 = arith.addf %8, %7 : vector<8x128xf32>
    %10 = vector.extract_strided_slice %0 {offsets = [0, 1], sizes = [8, 1], strides = [1, 1]} : vector<8x2xf32> to vector<8x1xf32>
    %11 = vector.extract_strided_slice %1 {offsets = [1, 0], sizes = [1, 128], strides = [1, 1]} : vector<3x128xf32> to vector<1x128xf32>
    %12 = vector.broadcast %10 : vector<8x1xf32> to vector<8x128xf32>
    %13 = vector.broadcast %11 : vector<1x128xf32> to vector<8x128xf32>
    %14 = arith.mulf %12, %13 : vector<8x128xf32>
    %15 = arith.addf %9, %14 : vector<8x128xf32>
    %16 = math.sin %15 : vector<8x128xf32>
    %c0_3 = arith.constant 0 : index
    %c0_4 = arith.constant 0 : index
    %17 = vector.load %arg3[%c0_3, %c0_4] : memref<8x128xf32, #tpu.memory_space<vmem>>, vector<8x128xf32>
    tpu.vector_store %arg3[%c0_3, %c0_4], %16 {strides = array<i32>} : memref<8x128xf32, #tpu.memory_space<vmem>>, vector<8x128xf32>,
    return
  }
  func.func @transform_0(%arg0: i32) -> (i32, i32) {
    %c0_i32 = arith.constant 0 : i32
    %c0_i32_0 = arith.constant 0 : i32
    return %arg0, %c0_i32 : i32, i32
  }
  func.func @transform_1(%arg0: i32) -> (i32, i32) {
    %c0_i32 = arith.constant 0 : i32
    %c0_i32_0 = arith.constant 0 : i32
    %c0_i32_1 = arith.constant 0 : i32
    return %c0_i32, %c0_i32_0 : i32, i32
  }
  func.func @transform_2(%arg0: i32) -> (i32, i32) {
    %c0_i32 = arith.constant 0 : i32
    %c0_i32_0 = arith.constant 0 : i32
    return %arg0, %c0_i32 : i32, i32
  }
}

</mosaic_0001>

<llo_original>
// kernel: tpu_custom_call.1
$region0: #{tpu_custom_call.1}
  #allocation0 [shape = 'u32[]', space=smem, size = 0x4, offset = 0x4, fixed_abs, tag = 'smem constant byte address 0x4 - core index']
  #allocation1 [shape = 'u32[144,128]{1,0:T(1,128)}', space=vmem, size = 0x12000, scoped, tag = 'internal scratch']
  %s0 = inlined_call_operand.vmem [shape: f32[8,2], index: 0, kind: input, shape index: {}]
  %s1 = inlined_call_operand.vmem [shape: f32[3,128], index: 1, kind: input, shape index: {}]
  %s2 = inlined_call_operand.hbm [shape: f32[8,128], index: 2, kind: output, shape index: {}]
  %s3 = sld [smem:[#allocation0]]
  $region18: #{tpu_custom_call.1} parent=0
    _
  %s5 = ssub.s32 1, %s3
  %s6 = scalar_select 0, %s5, %s3
  $region1: #{tpu_custom_call.1} parent=0
    #allocation2 [shape = 'u8[4096]{0}', space=vmem, size = 0x1000, scoped, tag = 'output window, operand 0, single buffered']
    #allocation3 [shape = 's32[1]{0}', space=sflag, size = 0x4, scoped, tag = 'scoped memory for tpu_custom_call.1']
    %7 = vsyncpa [#allocation3], 0
    // Predicated region
    $region2: #{tpu_custom_call.1} parent=1 // pred_check
      _
    $region3: #{tpu_custom_call.1} parent=1 // pred_check_branch
      %9 = sbr.rel (0) target = $region5
    $region4: #{tpu_custom_call.1} parent=1 // pred_region
      _
    $region5: #{tpu_custom_call.1} parent=1 // pred_fallthru
      _
    // Predicated region
    $region6: #{tpu_custom_call.1} parent=1 // pred_check
      _
    $region7: #{tpu_custom_call.1} parent=1 // pred_check_branch
      %11 = sbr.rel (0) target = $region9
    $region8: #{tpu_custom_call.1} parent=1 // pred_region
      _
    $region9: #{tpu_custom_call.1} parent=1 // pred_fallthru
      _
    %v12 = vld [vmem:[%s0] sm:$0xff]
    %v13 = vld [vmem:[%s1] sm:$0x7]
    %15 = vset.pattern.permute.xlu0 0
    %16 = vperm.xlu0 %15, %v12
    %v17 = vpop.permute.xlu0 %16
    %v19 = vlaneseq
    %v20 = vshrl.u32 %v19, 7
    %v21 = vsub.s32 0, %v20
    %v22 = vrot.slane %v13, %v21
    %v23 = vmul.f32 %v17, %v22
    %v24 = vlaneseq
    %v25 = vshrl.u32 %v24, 7
    %v26 = vsub.s32 2, %v25
    %v27 = vrot.slane %v13, %v26
    %v28 = vadd.f32 %v27, %v23
    %29 = vset.pattern.permute.xlu0 1
    %30 = vperm.xlu0 %29, %v12
    %v31 = vpop.permute.xlu0 %30
    %v33 = vlaneseq
    %v34 = vshrl.u32 %v33, 7
    %v35 = vsub.s32 1, %v34
    %v36 = vrot.slane %v13, %v35
    %v37 = vmul.f32 %v31, %v36
    %v38 = vadd.f32 %v28, %v37
    %v39 = vand.u32 2147483647, %v38
    %vm40 = vcmp.le.f32.partialorder %v39, 0.7853982
    %vm41 = vcmp.lt.s32.totalorder %v38, 0
    %v42 = vand.u32 %v38, 2139095040
    %v43 = vshrl.u32 %v42, 23
    %v44 = vsub.s32 %v43, 127
    %v45 = vand.u32 2147483647, %v38
    %v46 = vand.u32 %v45, 8388607
    %v47 = vor.u32 %v46, 8388608
    %v48 = vsub.s32 0, %v47
    %v49 = vadd.s32 %v44, 1
    %vm50 = vcmp.gt.s32.totalorder %v49, 0
    %v51 = vsel %vm50, %v49, 0
    %v52 = vshrl.u32 %v51, 5
    %v53 = vand.u32 %v51, 31
    %v54 = vsub.s32 32, %v53
    %v55 = vshrl.u32 683565275, %v54
    %v56 = vshll.u32 683565275, %v53
    %v57 = vshrl.u32 2475754826, %v54
    %v58 = vor.u32 %v56, %v57
    %v59 = vshll.u32 2475754826, %v53
    %v60 = vshrl.u32 2131351028, %v54
    %v61 = vor.u32 %v59, %v60
    %v62 = vshll.u32 2131351028, %v53
    %v63 = vshrl.u32 2102212464, %v54
    %v64 = vor.u32 %v62, %v63
    %v65 = vshll.u32 2102212464, %v53
    %v66 = vshrl.u32 920167782, %v54
    %v67 = vor.u32 %v65, %v66
    %v68 = vshll.u32 920167782, %v53
    %v69 = vshrl.u32 1326507024, %v54
    %v70 = vor.u32 %v68, %v69
    %vm71 = vcmp.lt.s32.totalorder %v52, 1
    %vm72 = vcmp.lt.s32.totalorder %v52, 2
    %vm73 = vcmp.lt.s32.totalorder %v52, 3
    %vm74 = vcmp.lt.s32.totalorder %v52, 4
    %v75 = vsel %vm71, %v55, %v58
    %v76 = vsel %vm74, %v64, 2102212464
    %v77 = vsel %vm73, %v61, %v76
    %v78 = vsel %vm72, %v75, %v77
    %v79 = vsel %vm71, %v58, %v61
    %v80 = vsel %vm74, %v67, 920167782
    %v81 = vsel %vm73, %v64, %v80
    %v82 = vsel %vm72, %v79, %v81
    %v83 = vsel %vm71, %v61, %v64
    %v84 = vsel %vm74, %v70, 1326507024
    %v85 = vsel %vm73, %v67, %v84
    %v86 = vsel %vm72, %v83, %v85
    %v87 = vshll.u32 %v47, 8
    %v88 = vmul.u32.u64.compose %v87, %v86
    %v89 = vextract.low.u32 %v88
    %v90 = vextract.high.u32 %v88
    %v91 = vmul.u32.u64.compose %v87, %v82
    %v92 = vextract.low.u32 %v91
    %v93 = vextract.high.u32 %v91
    %v94 = vmul.u32 %v87, %v78
    %v95 = vadd.s32 %v90, %v92
    %vm96 = vc.u32 %v90, %v92
    %v97 = vadd.s32 %v93, 1
    %v98 = vsel %vm96, %v97, %v93
    %v99 = vadd.s32 %v94, %v98
    %v100 = vadd.s32 %v99, 536870912
    %v101 = vshrl.u32 %v100, 30
    %v102 = vshll.u32 %v101, 30
    %v103 = vsub.s32 %v99, %v102
    %vm104 = vcmp.lt.s32.totalorder %v103, 0
    %v105 = vsub.s32 0, %v103
    %v106 = vsel %vm104, %v105, %v103
    %v107 = vclz %v106
    %v108 = vsub.s32 %v107, 2
    %vm109 = vcmp.gt.s32.totalorder 0, %v108
    %v110 = vsel %vm109, 0, %v108
    %v111 = vsub.s32 32, %v110
    %v112 = vshll.u32 %v103, %v110
    %v113 = vshrl.u32 %v95, %v111
    %v114 = vor.u32 %v112, %v113
    %v115 = vsub.s32 4294967266, %v110
    %v116 = vadd.s32 %v115, 127
    %v117 = vshll.u32 %v116, 23
    %v118 = vor.u32 4788187, %v117
    %v119 = vand.u32 2147483647, %v118
    %v121 = vcvt.s32.f32 %v114
    %v122 = vmul.f32 %v121, %v119
    %v123 = vxor.u32 %v122, 2147483648
    %v124 = vsel %vm41, %v123, %v122
    %v125 = vsub.s32 4, %v101
    %v126 = vsel %vm41, %v125, %v101
    %v127 = vsel %vm40, %v38, %v124
    %v128 = vsel %vm40, 0, %v126
    %v129 = vcosq.f32.pop %v127
    %v130 = vsinq.f32.pop %v127
    %vm131 = vweird.f32 %v38
    %v132 = vadd.s32 %v128, 3
    %v133 = vand.u32 %v132, 3
    %vm134 = vcmp.lt.s32.totalorder %v133, 2
    %vm135 = vcmp.eq.s32.totalorder %v133, 0
    %v136 = vxor.u32 %v130, 2147483648
    %v137 = vsel %vm135, %v129, %v136
    %vm138 = vcmp.eq.s32.totalorder %v133, 2
    %v139 = vxor.u32 %v129, 2147483648
    %v140 = vsel %vm138, %v139, %v130
    %v141 = vsel %vm134, %v137, %v140
    %v142 = vsel %vm131, nan, %v141
    %143 = vst [vmem:[#allocation2] sm:$0xff] %v142
    // Predicated region
    $region10: #{tpu_custom_call.1} parent=1 // pred_check
      _
    $region11: #{tpu_custom_call.1} parent=1 // pred_check_branch
      %145 = sbr.rel (0) target = $region13
    $region12: #{tpu_custom_call.1} parent=1 // pred_region
      %s147 = ssub.s32 128, 128
      %148 = vsyncadd [#allocation3], %s147
      %s150 = sshll.u32 [#allocation2], 4
      %s151 = int_to_ptr.vmem [resolvable:$true] %s150
      %153 = dma.vmem_to_hbm [thread:$0]  %s151, 128, %s2, [#allocation3]
    $region13: #{tpu_custom_call.1} parent=1 // pred_fallthru
      _
    // Predicated region
    $region14: #{tpu_custom_call.1} parent=1 // pred_check
      _
    $region15: #{tpu_custom_call.1} parent=1 // pred_check_branch
      %155 = sbr.rel (0) target = $region17
    $region16: #{tpu_custom_call.1} parent=1 // pred_region
      %156 = dma.done [#allocation3], 128
    $region17: #{tpu_custom_call.1} parent=1 // pred_fallthru
      _
    %157 = vsyncpa [#allocation3], 1

</llo_original>
